<compile_context>
chip_gen: v7x
topology: tpu7x:2x2x1
jax: 0.10.0
libtpu: 0.0.40
codegen_flags: <defaults>
</compile_context>

<pallas_src>
import functools

import jax
import jax.numpy as jnp
from jax.experimental import pallas as pl
from jax.experimental.pallas import tpu as pltpu

LANES = 128
SUBLANES = 8


def _msle_kernel(pred_ref, true_ref, out_ref, *,
                 rows_per_tile, tiles_per_core, rows_total, need_mask):
    # pred_ref / true_ref : (rows_per_tile, 128) input blocks in VMEM
    # out_ref             : (1, 8, 128) f32 per-core partial-sum accumulator
    c = pl.program_id(0)   # core index ("parallel")
    i = pl.program_id(1)   # tile index within this core ("arbitrary"/reduction)

    @pl.when(i == 0)
    def _():
        out_ref[...] = jnp.zeros_like(out_ref)

    p = pred_ref[...].astype(jnp.float32)
    t = true_ref[...].astype(jnp.float32)
    d = jnp.log1p(p) - jnp.log1p(t)          # == log(p + 1) - log(t + 1)
    sq = d * d

    if need_mask:
        # Rows past the true row count contain garbage (partial last block or
        # fully-virtual tile from the 2-core split) — mask BEFORE accumulating.
        tile_idx = c * tiles_per_core + i
        row = tile_idx * rows_per_tile + jax.lax.broadcasted_iota(
            jnp.int32, (rows_per_tile, 1), 0)
        sq = jnp.where(row < rows_total, sq, 0.0)

    # (rows_per_tile, 128) -> (8, 128): pure vreg adds in the VPU slot.
    partial = sq.reshape(rows_per_tile // SUBLANES, SUBLANES, LANES).sum(axis=0)
    out_ref[...] += partial[None, :, :]


def msle_loss(y_pred, y_true, *, max_rows_per_tile=4096):
    """Pallas implementation of MSLELoss.forward(y_pred, y_true)."""
    assert y_pred.shape == y_true.shape, (y_pred.shape, y_true.shape)
    n = int(y_pred.size)
    assert n > 0
    inv_n = 1.0 / n

    p = y_pred.reshape(-1)
    t = y_true.reshape(-1)

    rows_total = n // LANES
    tail = n - rows_total * LANES

    # Ragged (< 128 element) remainder: tiny pure-JAX partial sum.
    tail_sum = jnp.float32(0.0)
    if tail:
        dp = jnp.log1p(p[rows_total * LANES:].astype(jnp.float32))
        dt = jnp.log1p(t[rows_total * LANES:].astype(jnp.float32))
        dd = dp - dt
        tail_sum = jnp.sum(dd * dd)

    if rows_total == 0:
        # Fewer than 128 elements total: nothing for the kernel to do.
        return tail_sum * inv_n

    if tail:
        # This prefix slice copies the bulk once, but only triggers when n is
        # not a multiple of 128 (the old version padded whenever n wasn't a
        # multiple of rows_per_tile * 128, i.e. almost always).
        p = p[: rows_total * LANES]
        t = t[: rows_total * LANES]
    p2 = p.reshape(rows_total, LANES)
    t2 = t.reshape(rows_total, LANES)

    # Rows per tile: multiple of 8 (f32 sublane tiling).  4096 x 128 x 4 B =
    # 2 MiB per buffer -> 8 MiB with 2 inputs x double buffering.
    rows_per_tile = min(max_rows_per_tile,
                        ((rows_total + SUBLANES - 1) // SUBLANES) * SUBLANES)
    num_tiles = pl.cdiv(rows_total, rows_per_tile)

    # Split tiles across 2 cores (v7x megacore); a cheap outer loop elsewhere.
    num_cores = 2 if num_tiles >= 2 else 1
    tiles_per_core = pl.cdiv(num_tiles, num_cores)
    virtual_tiles = num_cores * tiles_per_core
    need_mask = virtual_tiles * rows_per_tile != rows_total
    need_clamp = virtual_tiles > num_tiles   # core 1 may own a fully-OOB tile

    if need_clamp:
        def in_map(c, i):
            # Clamp so the DMA'd block index is always valid; the in-kernel
            # row mask (computed from the *intended* tile index) zeroes the
            # duplicated data.
            return (jnp.minimum(c * tiles_per_core + i, num_tiles - 1), 0)
    else:
        def in_map(c, i):
            return (c * tiles_per_core + i, 0)

    kernel = functools.partial(
        _msle_kernel,
        rows_per_tile=rows_per_tile,
        tiles_per_core=tiles_per_core,
        rows_total=rows_total,
        need_mask=need_mask,
    )

    partials = pl.pallas_call(
        kernel,
        out_shape=jax.ShapeDtypeStruct((num_cores, SUBLANES, LANES), jnp.float32),
        grid_spec=pltpu.PrefetchScalarGridSpec(
            num_scalar_prefetch=0,
            grid=(num_cores, tiles_per_core),
            in_specs=[
                pl.BlockSpec((rows_per_tile, LANES), in_map),
                pl.BlockSpec((rows_per_tile, LANES), in_map),
            ],
            out_specs=pl.BlockSpec((1, SUBLANES, LANES), lambda c, i: (c, 0, 0)),
        ),
        compiler_params=pltpu.CompilerParams(
            dimension_semantics=("parallel", "arbitrary"),
        ),
    )(p2, t2)

    # Final tiny reduce (<= 2x8x128 f32) + mean scale in plain JAX.
    return (jnp.sum(partials) + tail_sum) * inv_n


def msle_loss_ref(y_pred, y_true):
    """Pure-JAX reference mirroring the PyTorch module exactly."""
    d = jnp.log1p(y_pred.astype(jnp.float32)) - jnp.log1p(y_true.astype(jnp.float32))
    return jnp.mean(d * d)


if __name__ == "__main__":
    key = jax.random.PRNGKey(0)
    k1, k2, k3, k4, k5, k6 = jax.random.split(key, 6)

    # Primary: small 4-D tensor (batch=2, channels=4, spatial=16x16); n%128==0.
    shape = (2, 4, 16, 16)
    yp = jax.random.uniform(k1, shape, jnp.float32, 0.0, 2.0)
    yt = jax.random.uniform(k2, shape, jnp.float32, 0.0, 2.0)
    out = jax.block_until_ready(msle_loss(yp, yt))
    ref = msle_loss_ref(yp, yt)
    assert jnp.allclose(out, ref, rtol=1e-5, atol=1e-5), (out, ref)

    # Ragged size (n % 128 != 0): exercises the pure-JAX tail path.
    shape2 = (7, 33)
    yp2 = jax.random.uniform(k3, shape2, jnp.float32, 0.0, 2.0)
    yt2 = jax.random.uniform(k4, shape2, jnp.float32, 0.0, 2.0)
    out2 = jax.block_until_ready(msle_loss(yp2, yt2))
    ref2 = msle_loss_ref(yp2, yt2)
    assert jnp.allclose(out2, ref2, rtol=1e-5, atol=1e-5), (out2, ref2)

    # Multi-tile + 2-core split + clamped virtual tile + in-kernel row mask,
    # forced with a tiny tile size so the test shape stays small.
    shape3 = (2, 10, 131)            # n = 2620 -> 20 full rows + 60-elem tail
    yp3 = jax.random.uniform(k5, shape3, jnp.float32, 0.0, 2.0)
    yt3 = jax.random.uniform(k6, shape3, jnp.float32, 0.0, 2.0)
    out3 = jax.block_until_ready(msle_loss(yp3, yt3, max_rows_per_tile=8))
    ref3 = msle_loss_ref(yp3, yt3)
    assert jnp.allclose(out3, ref3, rtol=1e-5, atol=1e-5), (out3, ref3)

    print("KERNEL_OK")
</pallas_src>

<mosaic_0001>
module attributes {stable_mosaic.version = 11 : i64} {
  func.func @_msle_kernel(%arg0: i32, %arg1: i32, %arg2: memref<16x128xf32, #tpu.memory_space<vmem>>, %arg3: memref<16x128xf32, #tpu.memory_space<vmem>>, %arg4: memref<1x8x128xf32, #tpu.memory_space<vmem>>) attributes {dimension_semantics = [#tpu.dimension_semantics<parallel>, #tpu.dimension_semantics<arbitrary>], iteration_bounds = array<i64: 1, 1>, scalar_prefetch = 0 : i64, scratch_operands = 0 : i64, tpu.core_type = #tpu.core_type<tc>, window_params = [{transform_indices = @transform_0, window_bounds = array<i64: 16, 128>}, {transform_indices = @transform_1, window_bounds = array<i64: 16, 128>}, {transform_indices = @transform_2, window_bounds = array<i64: 1, 8, 128>}]} {
    %c0_i32 = arith.constant 0 : i32
    %0 = arith.cmpi eq, %arg1, %c0_i32 : i32
    %1 = arith.extui %0 : i1 to i32
    %c0_i32_0 = arith.constant 0 : i32
    %2 = arith.cmpi ne, %1, %c0_i32_0 : i32
    scf.if %2 {
      %cst_10 = arith.constant 0.000000e+00 : f32
      %15 = vector.broadcast %cst_10 : f32 to vector<1x8x128xf32>
      %c0_11 = arith.constant 0 : index
      %c0_12 = arith.constant 0 : index
      %c0_13 = arith.constant 0 : index
      %16 = vector.load %arg4[%c0_11, %c0_12, %c0_13] : memref<1x8x128xf32, #tpu.memory_space<vmem>>, vector<1x8x128xf32>
      tpu.vector_store %arg4[%c0_11, %c0_12, %c0_13], %15 {strides = array<i32>} : memref<1x8x128xf32, #tpu.memory_space<vmem>>, vector<1x8x128xf32>,
    } else {
    }
    %c0 = arith.constant 0 : index
    %c0_1 = arith.constant 0 : index
    %3 = vector.load %arg2[%c0, %c0_1] : memref<16x128xf32, #tpu.memory_space<vmem>>, vector<16x128xf32>
    %c0_2 = arith.constant 0 : index
    %c0_3 = arith.constant 0 : index
    %4 = vector.load %arg3[%c0_2, %c0_3] : memref<16x128xf32, #tpu.memory_space<vmem>>, vector<16x128xf32>
    %5 = math.log1p %3 : vector<16x128xf32>
    %6 = math.log1p %4 : vector<16x128xf32>
    %7 = arith.subf %5, %6 : vector<16x128xf32>
    %8 = arith.mulf %7, %7 : vector<16x128xf32>
    %9 = vector.shape_cast %8 : vector<16x128xf32> to vector<2x8x128xf32>
    %cst = arith.constant dense<0.000000e+00> : vector<8x128xf32>
    %10 = vector.multi_reduction <add>, %9, %cst [0] : vector<2x8x128xf32> to vector<8x128xf32>
    %c0_4 = arith.constant 0 : index
    %c0_5 = arith.constant 0 : index
    %c0_6 = arith.constant 0 : index
    %11 = vector.load %arg4[%c0_4, %c0_5, %c0_6] : memref<1x8x128xf32, #tpu.memory_space<vmem>>, vector<1x8x128xf32>
    %12 = vector.shape_cast %10 : vector<8x128xf32> to vector<1x8x128xf32>
    %13 = arith.addf %11, %12 : vector<1x8x128xf32>
    %c0_7 = arith.constant 0 : index
    %c0_8 = arith.constant 0 : index
    %c0_9 = arith.constant 0 : index
    %14 = vector.load %arg4[%c0_7, %c0_8, %c0_9] : memref<1x8x128xf32, #tpu.memory_space<vmem>>, vector<1x8x128xf32>
    tpu.vector_store %arg4[%c0_7, %c0_8, %c0_9], %13 {strides = array<i32>} : memref<1x8x128xf32, #tpu.memory_space<vmem>>, vector<1x8x128xf32>,
    return
  }
  func.func @transform_0(%arg0: i32, %arg1: i32) -> (i32, i32) {
    %c1_i32 = arith.constant 1 : i32
    %0 = arith.muli %arg0, %c1_i32 : i32
    %1 = arith.addi %0, %arg1 : i32
    %c0_i32 = arith.constant 0 : i32
    %c0_i32_0 = arith.constant 0 : i32
    return %1, %c0_i32 : i32, i32
  }
  func.func @transform_1(%arg0: i32, %arg1: i32) -> (i32, i32) {
    %c1_i32 = arith.constant 1 : i32
    %0 = arith.muli %arg0, %c1_i32 : i32
    %1 = arith.addi %0, %arg1 : i32
    %c0_i32 = arith.constant 0 : i32
    %c0_i32_0 = arith.constant 0 : i32
    return %1, %c0_i32 : i32, i32
  }
  func.func @transform_2(%arg0: i32, %arg1: i32) -> (i32, i32, i32) {
    %c0_i32 = arith.constant 0 : i32
    %c0_i32_0 = arith.constant 0 : i32
    %c0_i32_1 = arith.constant 0 : i32
    return %arg0, %c0_i32, %c0_i32_0 : i32, i32, i32
  }
}

</mosaic_0001>

<llo_original>
// kernel: tpu_custom_call.1
$region0: #{tpu_custom_call.1}
  #allocation0 [shape = 'u32[]', space=smem, size = 0x4, offset = 0x4, fixed_abs, tag = 'smem constant byte address 0x4 - core index']
  #allocation1 [shape = 'u32[144,128]{1,0:T(1,128)}', space=vmem, size = 0x12000, scoped, tag = 'internal scratch']
  %s0 = inlined_call_operand.hbm [shape: f32[16,128], index: 0, kind: input, shape index: {}]
  %s1 = inlined_call_operand.hbm [shape: f32[16,128], index: 1, kind: input, shape index: {}]
  %s2 = inlined_call_operand.hbm [shape: f32[1,8,128], index: 2, kind: output, shape index: {}]
  %s3 = sld [smem:[#allocation0]]
  $region30: #{tpu_custom_call.1} parent=0
    _
  %s5 = ssub.s32 1, %s3
  %s6 = scalar_select 0, %s5, %s3
  $region1: #{tpu_custom_call.1} parent=0
    #allocation2 [shape = 'u8[8192]{0}', space=vmem, size = 0x2000, scoped, tag = 'input window, operand 0, single buffered']
    #allocation3 [shape = 's32[1]{0}', space=sflag, size = 0x4, scoped, tag = 'scoped memory for tpu_custom_call.1']
    #allocation4 [shape = 's32[1]{0}', space=sflag, size = 0x4, scoped, tag = 'scoped memory for tpu_custom_call.1']
    #allocation5 [shape = 'u8[8192]{0}', space=vmem, size = 0x2000, scoped, tag = 'input window, operand 1, single buffered']
    #allocation6 [shape = 's32[1]{0}', space=sflag, size = 0x4, scoped, tag = 'scoped memory for tpu_custom_call.1']
    #allocation7 [shape = 'u8[4096]{0}', space=vmem, size = 0x1000, scoped, tag = 'output window, operand 0, single buffered']
    %7 = vsyncpa [#allocation3], 0
    %8 = vsyncpa [#allocation6], 0
    %9 = vsyncpa [#allocation4], 0
    // Predicated region
    $region2: #{tpu_custom_call.1} parent=1 // pred_check
      _
    $region3: #{tpu_custom_call.1} parent=1 // pred_check_branch
      %11 = sbr.rel (0) target = $region5
    $region4: #{tpu_custom_call.1} parent=1 // pred_region
      %s12 = sadd.s32 0, 0
      %s13 = smul.u32 2, %s12
      %s15 = ssub.s32 256, 256
      %16 = vsyncadd [#allocation3], %s15
      %s17 = smul.addr %s13, 128
      %s18 = scalar_lea.hbm %s0, %s17
      %s19 = sshll.u32 [#allocation2], 4
      %s20 = int_to_ptr.vmem [resolvable:$true] %s19
      %25 = dma.hbm_to_vmem [thread:$0]  %s18, 256, %s20, [#allocation3], 128, 128, 8
    $region5: #{tpu_custom_call.1} parent=1 // pred_fallthru
      _
    // Predicated region
    $region6: #{tpu_custom_call.1} parent=1 // pred_check
      _
    $region7: #{tpu_custom_call.1} parent=1 // pred_check_branch
      %27 = sbr.rel (0) target = $region9
    $region8: #{tpu_custom_call.1} parent=1 // pred_region
      %s28 = sadd.s32 0, 0
      %s29 = smul.u32 2, %s28
      %s31 = ssub.s32 256, 256
      %32 = vsyncadd [#allocation6], %s31
      %s33 = smul.addr %s29, 128
      %s34 = scalar_lea.hbm %s1, %s33
      %s35 = sshll.u32 [#allocation5], 4
      %s36 = int_to_ptr.vmem [resolvable:$true] %s35
      %41 = dma.hbm_to_vmem [thread:$0]  %s34, 256, %s36, [#allocation6], 128, 128, 8
    $region9: #{tpu_custom_call.1} parent=1 // pred_fallthru
      _
    // Predicated region
    $region10: #{tpu_custom_call.1} parent=1 // pred_check
      _
    $region11: #{tpu_custom_call.1} parent=1 // pred_check_branch
      %43 = sbr.rel (0) target = $region13
    $region12: #{tpu_custom_call.1} parent=1 // pred_region
      %44 = dma.done [#allocation3], 256
    $region13: #{tpu_custom_call.1} parent=1 // pred_fallthru
      _
    // Predicated region
    $region14: #{tpu_custom_call.1} parent=1 // pred_check
      _
    $region15: #{tpu_custom_call.1} parent=1 // pred_check_branch
      %46 = sbr.rel (0) target = $region17
    $region16: #{tpu_custom_call.1} parent=1 // pred_region
      %47 = dma.done [#allocation6], 256
    $region17: #{tpu_custom_call.1} parent=1 // pred_fallthru
      _
    %s48 = sadd.s32 0, 0
    %s49 = smul.u32 2, %s48
    %s50 = sadd.s32 0, 0
    %s51 = smul.u32 2, %s50
    %p52 = scmp.eq.s32.totalorder 0, 0
    // Predicated region
    $region18: #{tpu_custom_call.1} parent=1 // pred_check
      %p53 = pneg %p52
    $region19: #{tpu_custom_call.1} parent=1 // pred_check_branch
      %55 = sbr.rel (%p53) target = $region21
    $region20: #{tpu_custom_call.1} parent=1 // pred_region
      %56 = vst [vmem:[#allocation7] sm:$0xff] 0.0
    $region21: #{tpu_custom_call.1} parent=1 // pred_fallthru
      _
    %v57 = vld [vmem:[#allocation2] sm:$0xff]
    %v58 = vld [vmem:[#allocation2 + $0x8] sm:$0xff]
    %v59 = vld [vmem:[#allocation5] sm:$0xff]
    %v60 = vld [vmem:[#allocation5 + $0x8] sm:$0xff]
    %v61 = vadd.f32 %v57, 1.0
    %v62 = vlog2.pop %v61
    %v63 = vmul.f32 %v62, 0.6931472
    %v64 = vmul.f32 -0.5, %v57
    %v65 = vadd.f32 %v64, 1.0
    %v66 = vmul.f32 %v65, %v57
    %v67 = vand.u32 2147483647, %v57
    %vm68 = vcmp.lt.f32.partialorder %v67, 0.0004427343
    %v69 = vsel %vm68, %v66, %v63
    %v70 = vadd.f32 %v58, 1.0
    %v71 = vlog2.pop %v70
    %v72 = vmul.f32 %v71, 0.6931472
    %v73 = vmul.f32 -0.5, %v58
    %v74 = vadd.f32 %v73, 1.0
    %v75 = vmul.f32 %v74, %v58
    %v76 = vand.u32 2147483647, %v58
    %vm77 = vcmp.lt.f32.partialorder %v76, 0.0004427343
    %v78 = vsel %vm77, %v75, %v72
    %v79 = vadd.f32 %v59, 1.0
    %v80 = vlog2.pop %v79
    %v81 = vmul.f32 %v80, 0.6931472
    %v82 = vmul.f32 -0.5, %v59
    %v83 = vadd.f32 %v82, 1.0
    %v84 = vmul.f32 %v83, %v59
    %v85 = vand.u32 2147483647, %v59
    %vm86 = vcmp.lt.f32.partialorder %v85, 0.0004427343
    %v87 = vsel %vm86, %v84, %v81
    %v88 = vadd.f32 %v60, 1.0
    %v89 = vlog2.pop %v88
    %v90 = vmul.f32 %v89, 0.6931472
    %v91 = vmul.f32 -0.5, %v60
    %v92 = vadd.f32 %v91, 1.0
    %v93 = vmul.f32 %v92, %v60
    %v94 = vand.u32 2147483647, %v60
    %vm95 = vcmp.lt.f32.partialorder %v94, 0.0004427343
    %v96 = vsel %vm95, %v93, %v90
    %v97 = vsub.f32 %v69, %v87
    %v98 = vsub.f32 %v78, %v96
    %v99 = vmul.f32 %v97, %v97
    %v100 = vmul.f32 %v98, %v98
    %v101 = vadd.f32 %v99, %v100
    %v102 = vld [vmem:[#allocation7] sm:$0xff]
    %v103 = vadd.f32 %v102, %v101
    %104 = vst [vmem:[#allocation7] sm:$0xff] %v103
    // Predicated region
    $region22: #{tpu_custom_call.1} parent=1 // pred_check
      _
    $region23: #{tpu_custom_call.1} parent=1 // pred_check_branch
      %106 = sbr.rel (0) target = $region25
    $region24: #{tpu_custom_call.1} parent=1 // pred_region
      %s108 = ssub.s32 128, 128
      %109 = vsyncadd [#allocation4], %s108
      %s111 = sshll.u32 [#allocation7], 4
      %s112 = int_to_ptr.vmem [resolvable:$true] %s111
      %114 = dma.vmem_to_hbm [thread:$0]  %s112, 128, %s2, [#allocation4]
    $region25: #{tpu_custom_call.1} parent=1 // pred_fallthru
      _
    // Predicated region
    $region26: #{tpu_custom_call.1} parent=1 // pred_check
      _
    $region27: #{tpu_custom_call.1} parent=1 // pred_check_branch
      %116 = sbr.rel (0) target = $region29
    $region28: #{tpu_custom_call.1} parent=1 // pred_region
      %117 = dma.done [#allocation4], 128
    $region29: #{tpu_custom_call.1} parent=1 // pred_fallthru
      _
    %118 = vsyncpa [#allocation3], 1
    %119 = vsyncpa [#allocation6], 1
    %120 = vsyncpa [#allocation4], 1

</llo_original>
